<compile_context>
chip_gen: v6e
topology: v6e:2x2x1
jax: 0.10.0
libtpu: 0.0.40
codegen_flags: <defaults>
</compile_context>

<pallas_src>
import functools

import jax
import jax.numpy as jnp
from jax import lax
from jax.experimental import pallas as pl
from jax.experimental.pallas import tpu as pltpu

LANES = 128
SUBLANES = 8
CHUNK_ROWS = 128                       # fold granularity: (128,128) f32 = 16 vregs
TARGET_BLOCK_BYTES = 2 * 1024 * 1024   # ~2 MiB per input per pipeline buffer
MAX_BLOCK_ROWS = 16384
VMEM_LIMIT_BYTES = 32 * 1024 * 1024


def _sublane_packing(dtype):
    return max(1, 4 // jnp.dtype(dtype).itemsize)    # f32:1  bf16:2  i8:4


def _pick_unroll(n_chunks):
    for u in (8, 4, 2):
        if n_chunks >= u and n_chunks % u == 0:
            return u
    return True                        # small / odd chunk counts: fully unroll


def _contrib(p, t, w_mse, w_l1):
    """Per-element weighted contribution of MSE + L1 (pre mean-division)."""
    d = p.astype(jnp.float32) - t.astype(jnp.float32)
    a = jnp.abs(d)
    # d*d == |d|*|d|, so fold both terms into one multiply: |d|*(w_mse*|d| + w_l1)
    return a * (w_mse * a + w_l1)


def _fold_chunks(p_ref, t_ref, acc0, *, w_mse, w_l1, chunk, n_chunks,
                 masked, row0, total_rows):
    """Fold n_chunks x (chunk, 128) rows of the refs into an (8, 128) f32 partial."""
    groups = chunk // SUBLANES
    if masked:
        rid = lax.broadcasted_iota(jnp.int32, (chunk, LANES), 0)   # hoisted constant

    def body(c, acc):
        r0 = pl.multiple_of(c * chunk, chunk)
        contrib = _contrib(p_ref[pl.ds(r0, chunk), :],
                           t_ref[pl.ds(r0, chunk), :], w_mse, w_l1)
        if masked:
            global_rows = row0 + r0 + rid
            # Select (not multiply) so garbage/NaN in masked rows is discarded.
            contrib = jnp.where(global_rows < total_rows, contrib, 0.0)
        # Summing over the leading (non-layout) axis is pure VPU vreg adds.
        return acc + contrib.reshape(groups, SUBLANES, LANES).sum(axis=0)

    return lax.fori_loop(0, n_chunks, body, acc0, unroll=_pick_unroll(n_chunks))


def _combined_loss_small_kernel(p_ref, t_ref, out_ref, *, w_mse, w_l1, inv_n,
                                rows, chunk):
    n_full = rows // chunk
    rem = rows - n_full * chunk
    acc = jnp.zeros((SUBLANES, LANES), jnp.float32)
    if n_full:
        acc = _fold_chunks(p_ref, t_ref, acc, w_mse=w_mse, w_l1=w_l1,
                           chunk=chunk, n_chunks=n_full, masked=False,
                           row0=0, total_rows=rows)
    if rem:
        # rem is a multiple of the sublane-packing row count (8 f32 / 16 bf16).
        r0 = n_full * chunk
        contrib = _contrib(p_ref[pl.ds(r0, rem), :],
                           t_ref[pl.ds(r0, rem), :], w_mse, w_l1)
        acc = acc + contrib.reshape(rem // SUBLANES, SUBLANES, LANES).sum(axis=0)
    out_ref[...] = jnp.sum(acc, axis=(0, 1), keepdims=True) * inv_n


def _combined_loss_big_kernel(p_ref, t_ref, out_ref, acc_ref, *, w_mse, w_l1,
                              inv_n, block_rows, chunk, blocks_per_split,
                              total_rows, any_mask):
    i = pl.program_id(1)

    @pl.when(i == 0)
    def _():
        acc_ref[...] = jnp.zeros_like(acc_ref)

    n_chunks = block_rows // chunk
    fold = functools.partial(_fold_chunks, p_ref, t_ref,
                             jnp.zeros((SUBLANES, LANES), jnp.float32),
                             w_mse=w_mse, w_l1=w_l1, chunk=chunk,
                             n_chunks=n_chunks, total_rows=total_rows)

    if any_mask:
        lb = pl.program_id(0) * blocks_per_split + i      # logical block index
        needs_mask = (lb + 1) * block_rows > total_rows

        @pl.when(needs_mask)                 # ragged tail or clamped duplicate block
        def _():
            acc_ref[...] += fold(masked=True, row0=lb * block_rows)

        @pl.when(jnp.logical_not(needs_mask))   # interior blocks: unmasked hot loop
        def _():
            acc_ref[...] += fold(masked=False, row0=0)
    else:
        acc_ref[...] += fold(masked=False, row0=0)

    @pl.when(i == pl.num_programs(1) - 1)
    def _():
        out_ref[...] = jnp.sum(acc_ref[...], axis=(0, 1), keepdims=True) * inv_n


def combined_loss(predictions, targets, weights=(2.0, 1.0)):
    """Weighted MSE + L1 loss, weights normalized to sum to 1 (scalar output)."""
    assert predictions.shape == targets.shape
    wsum = float(sum(weights))
    w_mse = float(weights[0]) / wsum
    w_l1 = float(weights[1]) / wsum

    n_elem = int(predictions.size)
    inv_n = 1.0 / float(n_elem)

    p_flat = predictions.reshape(-1)
    t_flat = targets.reshape(-1)

    # Rows must be a multiple of 8 * packing so full-array / remainder slices
    # stay tile-aligned for sub-32-bit dtypes.
    packing = max(_sublane_packing(predictions.dtype),
                  _sublane_packing(targets.dtype))
    mult = SUBLANES * packing * LANES
    pad = (-n_elem) % mult
    if pad:
        # Zero-pad BOTH tensors (d == 0 -> exact).  No-op for aligned shapes.
        # TODO(synk): replace with a bulk+tail decomposition so ragged sizes do
        # not pay a full O(n) pad copy of both inputs in HBM.
        p_flat = jnp.pad(p_flat, (0, pad))
        t_flat = jnp.pad(t_flat, (0, pad))

    rows = (n_elem + pad) // LANES
    p2 = p_flat.reshape(rows, LANES)     # native dtype -- no wrapper f32 cast
    t2 = t_flat.reshape(rows, LANES)

    # ~2 MiB (by the wider input dtype) per input per pipeline buffer.
    itemsize = max(jnp.dtype(predictions.dtype).itemsize,
                   jnp.dtype(targets.dtype).itemsize)
    block_rows = TARGET_BLOCK_BYTES // (LANES * itemsize)
    block_rows = max(CHUNK_ROWS, min(MAX_BLOCK_ROWS, block_rows))
    block_rows -= block_rows % CHUNK_ROWS

    # ---- small-input fast path: one invocation, no grid bookkeeping ----
    if rows <= block_rows:
        kernel = functools.partial(_combined_loss_small_kernel,
                                   w_mse=w_mse, w_l1=w_l1, inv_n=inv_n,
                                   rows=rows, chunk=CHUNK_ROWS)
        out = pl.pallas_call(
            kernel,
            out_shape=jax.ShapeDtypeStruct((1, 1), jnp.float32),
            grid_spec=pltpu.PrefetchScalarGridSpec(
                num_scalar_prefetch=0,
                grid=(1,),
                in_specs=[pl.BlockSpec((rows, LANES), lambda i: (0, 0)),
                          pl.BlockSpec((rows, LANES), lambda i: (0, 0))],
                out_specs=pl.BlockSpec((1, 1), lambda i: (0, 0)),
            ),
            compiler_params=pltpu.CompilerParams(
                dimension_semantics=("arbitrary",),
                vmem_limit_bytes=VMEM_LIMIT_BYTES),
        )(p2, t2)
        return out[0, 0]

    # ---- large-input path: big blocks, fixed accumulator, always 2-way split ----
    blocks_total = pl.cdiv(rows, block_rows)          # >= 2 here
    n_split = 2                                       # keep both v7x TCs busy
    blocks_per_split = pl.cdiv(blocks_total, n_split)
    any_mask = (rows % block_rows != 0) or (blocks_total % n_split != 0)

    def in_map(p, i):
        # Clamp so the duplicated block of an odd split stays in bounds; the
        # kernel zeroes its contribution via the *logical* block index.
        return (jnp.minimum(p * blocks_per_split + i, blocks_total - 1), 0)

    kernel = functools.partial(
        _combined_loss_big_kernel,
        w_mse=w_mse, w_l1=w_l1, inv_n=inv_n,
        block_rows=block_rows, chunk=CHUNK_ROWS,
        blocks_per_split=blocks_per_split, total_rows=rows, any_mask=any_mask)

    partials = pl.pallas_call(
        kernel,
        out_shape=jax.ShapeDtypeStruct((n_split, 1), jnp.float32),
        grid_spec=pltpu.PrefetchScalarGridSpec(
            num_scalar_prefetch=0,
            grid=(n_split, blocks_per_split),
            in_specs=[pl.BlockSpec((block_rows, LANES), in_map),
                      pl.BlockSpec((block_rows, LANES), in_map)],
            out_specs=pl.BlockSpec((1, 1), lambda p, i: (p, 0)),
            scratch_shapes=[pltpu.VMEM((SUBLANES, LANES), jnp.float32)],
        ),
        compiler_params=pltpu.CompilerParams(
            dimension_semantics=("parallel", "arbitrary"),
            vmem_limit_bytes=VMEM_LIMIT_BYTES),
    )(p2, t2)
    return jnp.sum(partials)


def combined_loss_ref(predictions, targets, weights=(2.0, 1.0)):
    wsum = float(sum(weights))
    w_mse = float(weights[0]) / wsum
    w_l1 = float(weights[1]) / wsum
    d = predictions.astype(jnp.float32) - targets.astype(jnp.float32)
    return w_mse * jnp.mean(d * d) + w_l1 * jnp.mean(jnp.abs(d))


if __name__ == "__main__":
    key = jax.random.PRNGKey(0)
    weights = (2.0, 1.0)

    tests = [
        ((2, 4, 16, 16), jnp.float32),      # tiny, canonical -> fast path
        ((8, 16, 64, 64), jnp.float32),     # mid-size -> fast path, chunked fold
        ((3, 5, 17, 13), jnp.bfloat16),     # ragged, non-128-divisible -> pad path
        ((16, 16, 64, 64), jnp.float32),    # big path, even blocks, unmasked hot loop
        ((9, 16, 128, 128), jnp.bfloat16),  # big path, odd blocks + ragged tail
    ]

    for shape, dtype in tests:
        key, k1, k2 = jax.random.split(key, 3)
        predictions = jax.random.normal(k1, shape, dtype=jnp.float32).astype(dtype)
        targets = jax.random.normal(k2, shape, dtype=jnp.float32).astype(dtype)

        loss = jax.block_until_ready(combined_loss(predictions, targets, weights))
        ref = jax.block_until_ready(combined_loss_ref(predictions, targets, weights))
        assert jnp.allclose(loss, ref, rtol=5e-5, atol=1e-6), (shape, dtype, loss, ref)

    print("KERNEL_OK")
</pallas_src>

<mosaic_0001>
module attributes {stable_mosaic.version = 11 : i64} {
  func.func @_combined_loss_small_kernel(%arg0: i32, %arg1: memref<16x128xf32, #tpu.memory_space<vmem>>, %arg2: memref<16x128xf32, #tpu.memory_space<vmem>>, %arg3: memref<1x1xf32, #tpu.memory_space<vmem>>) attributes {dimension_semantics = [#tpu.dimension_semantics<arbitrary>], iteration_bounds = array<i64: 1>, scalar_prefetch = 0 : i64, scratch_operands = 0 : i64, tpu.core_type = #tpu.core_type<tc>, window_params = [{pipeline_mode = #tpu.pipeline_mode<synchronous>, transform_indices = @transform_0, window_bounds = array<i64: 16, 128>}, {pipeline_mode = #tpu.pipeline_mode<synchronous>, transform_indices = @transform_1, window_bounds = array<i64: 16, 128>}, {pipeline_mode = #tpu.pipeline_mode<synchronous>, transform_indices = @transform_2, window_bounds = array<i64: 1, 1>}]} {
    %cst = arith.constant 0.000000e+00 : f32
    %0 = vector.broadcast %cst : f32 to vector<8x128xf32>
    %c0 = arith.constant 0 : index
    %c0_0 = arith.constant 0 : index
    %1 = vector.load %arg1[%c0, %c0_0] : memref<16x128xf32, #tpu.memory_space<vmem>>, vector<16x128xf32>
    %c0_1 = arith.constant 0 : index
    %c0_2 = arith.constant 0 : index
    %2 = vector.load %arg2[%c0_1, %c0_2] : memref<16x128xf32, #tpu.memory_space<vmem>>, vector<16x128xf32>
    %3 = arith.subf %1, %2 : vector<16x128xf32>
    %4 = math.absf %3 : vector<16x128xf32>
    %cst_3 = arith.constant 0.666666686 : f32
    %5 = vector.broadcast %cst_3 : f32 to vector<16x128xf32>
    %6 = arith.mulf %5, %4 : vector<16x128xf32>
    %cst_4 = arith.constant 0.333333343 : f32
    %7 = vector.broadcast %cst_4 : f32 to vector<16x128xf32>
    %8 = arith.addf %6, %7 : vector<16x128xf32>
    %9 = arith.mulf %4, %8 : vector<16x128xf32>
    %10 = vector.shape_cast %9 : vector<16x128xf32> to vector<2x8x128xf32>
    %cst_5 = arith.constant dense<0.000000e+00> : vector<8x128xf32>
    %11 = vector.multi_reduction <add>, %10, %cst_5 [0] : vector<2x8x128xf32> to vector<8x128xf32>
    %12 = arith.addf %0, %11 : vector<8x128xf32>
    %13 = vector.shape_cast %12 : vector<8x128xf32> to vector<1x8x128xf32>
    %cst_6 = arith.constant dense<0.000000e+00> : vector<1xf32>
    %14 = vector.multi_reduction <add>, %13, %cst_6 [1, 2] : vector<1x8x128xf32> to vector<1xf32>
    %15 = vector.shape_cast %14 : vector<1xf32> to vector<1x1x1xf32>
    %16 = vector.extract %15[0, 0, 0] : f32 from vector<1x1x1xf32>
    %17 = vector.broadcast %16 : f32 to vector<1x1xf32>
    %cst_7 = arith.constant 4.8828125E-4 : f32
    %18 = vector.broadcast %cst_7 : f32 to vector<1x1xf32>
    %19 = arith.mulf %17, %18 : vector<1x1xf32>
    %c0_8 = arith.constant 0 : index
    %c0_9 = arith.constant 0 : index
    %20 = vector.load %arg3[%c0_8, %c0_9] : memref<1x1xf32, #tpu.memory_space<vmem>>, vector<1x1xf32>
    tpu.vector_store %arg3[%c0_8, %c0_9], %19 {strides = array<i32>} : memref<1x1xf32, #tpu.memory_space<vmem>>, vector<1x1xf32>,
    return
  }
  func.func @transform_0(%arg0: i32) -> (i32, i32) {
    %c0_i32 = arith.constant 0 : i32
    %c0_i32_0 = arith.constant 0 : i32
    %c0_i32_1 = arith.constant 0 : i32
    return %c0_i32, %c0_i32_0 : i32, i32
  }
  func.func @transform_1(%arg0: i32) -> (i32, i32) {
    %c0_i32 = arith.constant 0 : i32
    %c0_i32_0 = arith.constant 0 : i32
    %c0_i32_1 = arith.constant 0 : i32
    return %c0_i32, %c0_i32_0 : i32, i32
  }
  func.func @transform_2(%arg0: i32) -> (i32, i32) {
    %c0_i32 = arith.constant 0 : i32
    %c0_i32_0 = arith.constant 0 : i32
    %c0_i32_1 = arith.constant 0 : i32
    return %c0_i32, %c0_i32_0 : i32, i32
  }
}

</mosaic_0001>

<llo_original>
// kernel: tpu_custom_call.1
$region0: #{tpu_custom_call.1}
  #allocation0 [shape = 'u32[]', space=smem, size = 0x4, offset = 0x4, fixed_abs, tag = 'smem constant byte address 0x4 - core index']
  #allocation1 [shape = 'u32[144,128]{1,0:T(1,128)}', space=vmem, size = 0x12000, scoped, tag = 'internal scratch']
  %s0 = inlined_call_operand.hbm [shape: f32[16,128], index: 0, kind: input, shape index: {}]
  %s1 = inlined_call_operand.hbm [shape: f32[16,128], index: 1, kind: input, shape index: {}]
  %s2 = inlined_call_operand.hbm [shape: f32[1,1], index: 2, kind: output, shape index: {}]
  %s3 = sld [smem:[#allocation0]]
  $region26: #{tpu_custom_call.1} parent=0
    _
  %s5 = ssub.s32 1, %s3
  %s6 = scalar_select 0, %s5, %s3
  $region1: #{tpu_custom_call.1} parent=0
    #allocation2 [shape = 'u8[8192]{0}', space=vmem, size = 0x2000, scoped, tag = 'input window, operand 0, single buffered']
    #allocation3 [shape = 's32[1]{0}', space=sflag, size = 0x4, scoped, tag = 'scoped memory for tpu_custom_call.1']
    #allocation4 [shape = 's32[1]{0}', space=sflag, size = 0x4, scoped, tag = 'scoped memory for tpu_custom_call.1']
    #allocation5 [shape = 'u8[8192]{0}', space=vmem, size = 0x2000, scoped, tag = 'input window, operand 1, single buffered']
    #allocation6 [shape = 's32[1]{0}', space=sflag, size = 0x4, scoped, tag = 'scoped memory for tpu_custom_call.1']
    #allocation7 [shape = 'u8[512]{0}', space=vmem, size = 0x400, scoped, tag = 'output window, operand 0, single buffered']
    %7 = vsyncpa [#allocation3], 0
    %8 = vsyncpa [#allocation6], 0
    %9 = vsyncpa [#allocation4], 0
    // Predicated region
    $region2: #{tpu_custom_call.1} parent=1 // pred_check
      _
    $region3: #{tpu_custom_call.1} parent=1 // pred_check_branch
      %11 = sbr.rel (0) target = $region5
    $region4: #{tpu_custom_call.1} parent=1 // pred_region
      %s13 = ssub.s32 256, 256
      %14 = vsyncadd [#allocation3], %s13
      %s15 = sshll.u32 [#allocation2], 4
      %s16 = int_to_ptr.vmem [resolvable:$true] %s15
      %21 = dma.hbm_to_vmem [thread:$0]  %s0, 256, %s16, [#allocation3], 128, 128, 8
    $region5: #{tpu_custom_call.1} parent=1 // pred_fallthru
      _
    // Predicated region
    $region6: #{tpu_custom_call.1} parent=1 // pred_check
      _
    $region7: #{tpu_custom_call.1} parent=1 // pred_check_branch
      %23 = sbr.rel (0) target = $region9
    $region8: #{tpu_custom_call.1} parent=1 // pred_region
      %s25 = ssub.s32 256, 256
      %26 = vsyncadd [#allocation6], %s25
      %s27 = sshll.u32 [#allocation5], 4
      %s28 = int_to_ptr.vmem [resolvable:$true] %s27
      %33 = dma.hbm_to_vmem [thread:$0]  %s1, 256, %s28, [#allocation6], 128, 128, 8
    $region9: #{tpu_custom_call.1} parent=1 // pred_fallthru
      _
    // Predicated region
    $region10: #{tpu_custom_call.1} parent=1 // pred_check
      _
    $region11: #{tpu_custom_call.1} parent=1 // pred_check_branch
      %35 = sbr.rel (0) target = $region13
    $region12: #{tpu_custom_call.1} parent=1 // pred_region
      %36 = dma.done [#allocation3], 256
    $region13: #{tpu_custom_call.1} parent=1 // pred_fallthru
      _
    // Predicated region
    $region14: #{tpu_custom_call.1} parent=1 // pred_check
      _
    $region15: #{tpu_custom_call.1} parent=1 // pred_check_branch
      %38 = sbr.rel (0) target = $region17
    $region16: #{tpu_custom_call.1} parent=1 // pred_region
      %39 = dma.done [#allocation6], 256
    $region17: #{tpu_custom_call.1} parent=1 // pred_fallthru
      _
    %v40 = vld [vmem:[#allocation2] sm:$0xff]
    %v41 = vld [vmem:[#allocation2 + $0x8] sm:$0xff]
    %v42 = vld [vmem:[#allocation5] sm:$0xff]
    %v43 = vld [vmem:[#allocation5 + $0x8] sm:$0xff]
    %v44 = vsub.f32 %v40, %v42
    %v45 = vsub.f32 %v41, %v43
    %v46 = vand.u32 2147483647, %v44
    %v47 = vand.u32 2147483647, %v45
    %v48 = vmul.f32 %v46, 0.6666667
    %v49 = vmul.f32 %v47, 0.6666667
    %v50 = vadd.f32 %v48, 0.33333334
    %v51 = vadd.f32 %v49, 0.33333334
    %v52 = vmul.f32 %v46, %v50
    %v53 = vmul.f32 %v47, %v51
    %v54 = vadd.f32 %v52, %v53
    %v55 = vadd.f32 %v54, 0.0
    %56 = vadd.xlane.f32.xlu0 %v55
    %v57 = vpop.xlane.xlu0 %56
    %v58 = vrot.slane %v57, 4
    %v59 = vadd.f32 %v57, %v58
    %v60 = vrot.slane %v59, 2
    %v61 = vadd.f32 %v59, %v60
    %v62 = vrot.slane %v61, 1
    %v63 = vadd.f32 %v61, %v62
    %s64 = vtos %v63
    %v65 = vstv %s64
    %v66 = vmul.f32 %v65, 0.00048828125
    %vm67 = vcmask 0
    %68 = vst.msk [vmem:[#allocation7] sm:$0x1] %vm67, %v66
    // Predicated region
    $region18: #{tpu_custom_call.1} parent=1 // pred_check
      _
    $region19: #{tpu_custom_call.1} parent=1 // pred_check_branch
      %70 = sbr.rel (0) target = $region21
    $region20: #{tpu_custom_call.1} parent=1 // pred_region
      %s72 = ssub.s32 16, 16
      %73 = vsyncadd [#allocation4], %s72
      %s75 = sshll.u32 [#allocation7], 4
      %s76 = int_to_ptr.vmem [resolvable:$true] %s75
      %78 = dma.vmem_to_hbm [thread:$0]  %s76, 16, %s2, [#allocation4]
    $region21: #{tpu_custom_call.1} parent=1 // pred_fallthru
      _
    // Predicated region
    $region22: #{tpu_custom_call.1} parent=1 // pred_check
      _
    $region23: #{tpu_custom_call.1} parent=1 // pred_check_branch
      %80 = sbr.rel (0) target = $region25
    $region24: #{tpu_custom_call.1} parent=1 // pred_region
      %81 = dma.done [#allocation4], 16
    $region25: #{tpu_custom_call.1} parent=1 // pred_fallthru
      _
    %82 = vsyncpa [#allocation3], 1
    %83 = vsyncpa [#allocation6], 1
    %84 = vsyncpa [#allocation4], 1

</llo_original>
